<compile_context>
chip_gen: v6e
topology: v6e:2x2x1
jax: 0.10.0
libtpu: 0.0.40
codegen_flags: <defaults>
</compile_context>

<pallas_src>
import jax
import jax.numpy as jnp
from jax.experimental import pallas as pl
from jax.experimental.pallas import tpu as pltpu


def _round_up(n, m):
    return ((n + m - 1) // m) * m


def cls_kernel(x_ref, w1_ref, b1_ref, w2_ref, b2_ref, w3_ref, b3_ref, out_ref):
    # encoder: Linear + ReLU   (bf16 operands, f32 MXU accumulation)
    h = jnp.dot(x_ref[...], w1_ref[...], preferred_element_type=jnp.float32)
    h = jnp.maximum(h + b1_ref[...], 0.0)

    # snn: Linear + ReLU
    h = jnp.dot(h.astype(jnp.bfloat16), w2_ref[...], preferred_element_type=jnp.float32)
    h = jnp.maximum(h + b2_ref[...], 0.0)

    # decoder: Linear + LogSoftmax
    # (padded class columns carry bias -1e30, so exp underflows to exactly 0 in the LSE)
    logits = jnp.dot(h.astype(jnp.bfloat16), w3_ref[...], preferred_element_type=jnp.float32)
    logits = logits + b3_ref[...]
    m = jnp.max(logits, axis=-1, keepdims=True)
    lse = m + jnp.log(jnp.sum(jnp.exp(logits - m), axis=-1, keepdims=True))
    out_ref[...] = (logits - lse).astype(out_ref.dtype)


def simple_cls_model(x, params, *, tb=256):
    """x: [B, IN] float32. params: (w1,b1,w2,b2,w3,b3). Returns log_p_y: [B, C] float32."""
    w1, b1, w2, b2, w3, b3 = params
    B, IN = x.shape
    H1, H2, C = w1.shape[1], w2.shape[1], w3.shape[1]

    # ---- padding: 128-lane feature dims, 8-multiple batch tile, ragged B allowed ----
    INp, H1p, H2p, Cp = (_round_up(d, 128) for d in (IN, H1, H2, C))
    tb = _round_up(tb, 8)
    tb_eff = min(tb, _round_up(B, 8))   # toy batches: single grid step with tb == B(pad8)
    Bp = _round_up(B, tb_eff)

    NEG = -1e30  # finite "minus infinity": padded classes drop out of the LSE without NaNs
    xp = jnp.zeros((Bp, INp), jnp.float32).at[:B, :IN].set(x).astype(jnp.bfloat16)
    w1p = jnp.zeros((INp, H1p), jnp.float32).at[:IN, :H1].set(w1).astype(jnp.bfloat16)
    w2p = jnp.zeros((H1p, H2p), jnp.float32).at[:H1, :H2].set(w2).astype(jnp.bfloat16)
    w3p = jnp.zeros((H2p, Cp), jnp.float32).at[:H2, :C].set(w3).astype(jnp.bfloat16)
    b1p = jnp.zeros((1, H1p), jnp.float32).at[:, :H1].set(b1)
    b2p = jnp.zeros((1, H2p), jnp.float32).at[:, :H2].set(b2)
    b3p = jnp.full((1, Cp), NEG, jnp.float32).at[:, :C].set(b3)

    grid = (Bp // tb_eff,)

    # Advisory cost estimate for the XLA scheduler.
    flops = 2 * Bp * (INp * H1p + H1p * H2p + H2p * Cp)
    bytes_accessed = int(
        Bp * INp * 2                                   # x (bf16)
        + (INp * H1p + H1p * H2p + H2p * Cp) * 2       # weights (bf16)
        + (H1p + H2p + Cp) * 4                         # biases (f32)
        + Bp * Cp * 4                                  # output (f32)
    )
    cost = pl.CostEstimate(flops=int(flops), transcendentals=int(Bp * Cp),
                           bytes_accessed=bytes_accessed)

    # Explicit VMEM budget: double-buffered tiles/weights + live f32 intermediates + headroom.
    block_bytes = (
        2 * (tb_eff * INp * 2 + tb_eff * Cp * 4)                 # x tile + out tile (x2 buffers)
        + 2 * (INp * H1p + H1p * H2p + H2p * Cp) * 2             # bf16 weights (x2 buffers)
        + 2 * (H1p + H2p + Cp) * 4                               # biases (x2 buffers)
        + tb_eff * (H1p + H2p + Cp) * 4                          # live f32 activations
    )
    vmem_limit = int(min(100 * 2**20, max(32 * 2**20, 2 * block_bytes)))

    out = pl.pallas_call(
        cls_kernel,
        out_shape=jax.ShapeDtypeStruct((Bp, Cp), jnp.float32),
        grid_spec=pltpu.PrefetchScalarGridSpec(
            num_scalar_prefetch=0,
            grid=grid,
            in_specs=[
                pl.BlockSpec((tb_eff, INp), lambda i: (i, 0)),   # x tile over batch
                pl.BlockSpec((INp, H1p), lambda i: (0, 0)),      # w1 (resident)
                pl.BlockSpec((1, H1p), lambda i: (0, 0)),        # b1
                pl.BlockSpec((H1p, H2p), lambda i: (0, 0)),      # w2
                pl.BlockSpec((1, H2p), lambda i: (0, 0)),        # b2
                pl.BlockSpec((H2p, Cp), lambda i: (0, 0)),       # w3
                pl.BlockSpec((1, Cp), lambda i: (0, 0)),         # b3
            ],
            out_specs=pl.BlockSpec((tb_eff, Cp), lambda i: (i, 0)),
        ),
        compiler_params=pltpu.CompilerParams(
            dimension_semantics=("parallel",),
            vmem_limit_bytes=vmem_limit,
        ),
        cost_estimate=cost,
    )(xp, w1p, b1p, w2p, b2p, w3p, b3p)

    return out[:B, :C]


def reference(x, params, matmul_dtype=jnp.float32):
    w1, b1, w2, b2, w3, b3 = params

    def lin(a, w, b):
        return jnp.dot(a.astype(matmul_dtype), w.astype(matmul_dtype),
                       preferred_element_type=jnp.float32) + b

    h = jnp.maximum(lin(x, w1, b1), 0.0)
    h = jnp.maximum(lin(h, w2, b2), 0.0)
    return jax.nn.log_softmax(lin(h, w3, b3), axis=-1)


if __name__ == "__main__":
    # Small shapes consistent with the forward pass.
    B, IN, H1, H2, C = 16, 32, 64, 64, 16

    key = jax.random.PRNGKey(0)
    kx, k1, k2, k3, k4, k5, k6, kx2 = jax.random.split(key, 8)

    x = jax.random.normal(kx, (B, IN), dtype=jnp.float32)

    # Deterministic parameter init (Kaiming-ish scaling).
    w1 = jax.random.normal(k1, (IN, H1), dtype=jnp.float32) * (2.0 / IN) ** 0.5
    b1 = jax.random.normal(k2, (1, H1), dtype=jnp.float32) * 0.01
    w2 = jax.random.normal(k3, (H1, H2), dtype=jnp.float32) * (2.0 / H1) ** 0.5
    b2 = jax.random.normal(k4, (1, H2), dtype=jnp.float32) * 0.01
    w3 = jax.random.normal(k5, (H2, C), dtype=jnp.float32) * (2.0 / H2) ** 0.5
    b3 = jax.random.normal(k6, (1, C), dtype=jnp.float32) * 0.01
    params = (w1, b1, w2, b2, w3, b3)

    # Toy batch: single grid step, tb == B.
    log_p_y = jax.block_until_ready(simple_cls_model(x, params))
    ref_bf16 = jax.block_until_ready(reference(x, params, matmul_dtype=jnp.bfloat16))
    ref_f32 = jax.block_until_ready(reference(x, params, matmul_dtype=jnp.float32))

    assert log_p_y.shape == (B, C)
    # Matches a bf16-matmul reference tightly (same arithmetic as the kernel).
    assert jnp.allclose(log_p_y, ref_bf16, atol=1e-3, rtol=1e-3)
    # Close to the f32 reference (bf16 operand rounding only).
    assert float(jnp.max(jnp.abs(log_p_y - ref_f32))) < 0.25
    # log-probabilities must normalize to 1 per row.
    assert jnp.allclose(jnp.sum(jnp.exp(log_p_y), axis=-1), 1.0, atol=1e-4)

    # Ragged batch + multi-step grid path (B=200 padded to 256, grid=(4,)).
    B2 = 200
    x2 = jax.random.normal(kx2, (B2, IN), dtype=jnp.float32)
    out2 = jax.block_until_ready(simple_cls_model(x2, params, tb=64))
    ref2 = jax.block_until_ready(reference(x2, params, matmul_dtype=jnp.bfloat16))
    assert out2.shape == (B2, C)
    assert jnp.allclose(out2, ref2, atol=1e-3, rtol=1e-3)
    assert jnp.allclose(jnp.sum(jnp.exp(out2), axis=-1), 1.0, atol=1e-4)

    print("KERNEL_OK")
</pallas_src>

<mosaic_0001>
module attributes {stable_mosaic.version = 11 : i64} {
  func.func @cls_kernel(%arg0: i32, %arg1: memref<16x128xbf16, #tpu.memory_space<vmem>>, %arg2: memref<128x128xbf16, #tpu.memory_space<vmem>>, %arg3: memref<1x128xf32, #tpu.memory_space<vmem>>, %arg4: memref<128x128xbf16, #tpu.memory_space<vmem>>, %arg5: memref<1x128xf32, #tpu.memory_space<vmem>>, %arg6: memref<128x128xbf16, #tpu.memory_space<vmem>>, %arg7: memref<1x128xf32, #tpu.memory_space<vmem>>, %arg8: memref<16x128xf32, #tpu.memory_space<vmem>>) attributes {dimension_semantics = [#tpu.dimension_semantics<parallel>], iteration_bounds = array<i64: 1>, scalar_prefetch = 0 : i64, scratch_operands = 0 : i64, tpu.core_type = #tpu.core_type<tc>, window_params = [{transform_indices = @transform_0, window_bounds = array<i64: 16, 128>}, {pipeline_mode = #tpu.pipeline_mode<synchronous>, transform_indices = @transform_1, window_bounds = array<i64: 128, 128>}, {pipeline_mode = #tpu.pipeline_mode<synchronous>, transform_indices = @transform_2, window_bounds = array<i64: 1, 128>}, {pipeline_mode = #tpu.pipeline_mode<synchronous>, transform_indices = @transform_3, window_bounds = array<i64: 128, 128>}, {pipeline_mode = #tpu.pipeline_mode<synchronous>, transform_indices = @transform_4, window_bounds = array<i64: 1, 128>}, {pipeline_mode = #tpu.pipeline_mode<synchronous>, transform_indices = @transform_5, window_bounds = array<i64: 128, 128>}, {pipeline_mode = #tpu.pipeline_mode<synchronous>, transform_indices = @transform_6, window_bounds = array<i64: 1, 128>}, {transform_indices = @transform_7, window_bounds = array<i64: 16, 128>}]} {
    %c0 = arith.constant 0 : index
    %c0_0 = arith.constant 0 : index
    %0 = vector.load %arg1[%c0, %c0_0] : memref<16x128xbf16, #tpu.memory_space<vmem>>, vector<16x128xbf16>
    %c0_1 = arith.constant 0 : index
    %c0_2 = arith.constant 0 : index
    %1 = vector.load %arg2[%c0_1, %c0_2] : memref<128x128xbf16, #tpu.memory_space<vmem>>, vector<128x128xbf16>
    %cst = arith.constant dense<0.000000e+00> : vector<16x128xf32>
    %2 = tpu.matmul %0, %1, %cst {dimension_numbers = #tpu.dot_dimension_numbers<[1], [0], [0], [1], [0, 0, 1, 1], [], []>} : vector<16x128xbf16>, vector<128x128xbf16>, vector<16x128xf32> -> vector<16x128xf32>
    %c0_3 = arith.constant 0 : index
    %c0_4 = arith.constant 0 : index
    %3 = vector.load %arg3[%c0_3, %c0_4] : memref<1x128xf32, #tpu.memory_space<vmem>>, vector<1x128xf32>
    %4 = vector.broadcast %3 : vector<1x128xf32> to vector<16x128xf32>
    %5 = arith.addf %2, %4 : vector<16x128xf32>
    %cst_5 = arith.constant 0.000000e+00 : f32
    %6 = vector.broadcast %cst_5 : f32 to vector<16x128xf32>
    %7 = arith.maximumf %5, %6 : vector<16x128xf32>
    %8 = arith.truncf %7 : vector<16x128xf32> to vector<16x128xbf16>
    %c0_6 = arith.constant 0 : index
    %c0_7 = arith.constant 0 : index
    %9 = vector.load %arg4[%c0_6, %c0_7] : memref<128x128xbf16, #tpu.memory_space<vmem>>, vector<128x128xbf16>
    %cst_8 = arith.constant dense<0.000000e+00> : vector<16x128xf32>
    %10 = tpu.matmul %8, %9, %cst_8 {dimension_numbers = #tpu.dot_dimension_numbers<[1], [0], [0], [1], [0, 0, 1, 1], [], []>} : vector<16x128xbf16>, vector<128x128xbf16>, vector<16x128xf32> -> vector<16x128xf32>
    %c0_9 = arith.constant 0 : index
    %c0_10 = arith.constant 0 : index
    %11 = vector.load %arg5[%c0_9, %c0_10] : memref<1x128xf32, #tpu.memory_space<vmem>>, vector<1x128xf32>
    %12 = vector.broadcast %11 : vector<1x128xf32> to vector<16x128xf32>
    %13 = arith.addf %10, %12 : vector<16x128xf32>
    %cst_11 = arith.constant 0.000000e+00 : f32
    %14 = vector.broadcast %cst_11 : f32 to vector<16x128xf32>
    %15 = arith.maximumf %13, %14 : vector<16x128xf32>
    %16 = arith.truncf %15 : vector<16x128xf32> to vector<16x128xbf16>
    %c0_12 = arith.constant 0 : index
    %c0_13 = arith.constant 0 : index
    %17 = vector.load %arg6[%c0_12, %c0_13] : memref<128x128xbf16, #tpu.memory_space<vmem>>, vector<128x128xbf16>
    %cst_14 = arith.constant dense<0.000000e+00> : vector<16x128xf32>
    %18 = tpu.matmul %16, %17, %cst_14 {dimension_numbers = #tpu.dot_dimension_numbers<[1], [0], [0], [1], [0, 0, 1, 1], [], []>} : vector<16x128xbf16>, vector<128x128xbf16>, vector<16x128xf32> -> vector<16x128xf32>
    %c0_15 = arith.constant 0 : index
    %c0_16 = arith.constant 0 : index
    %19 = vector.load %arg7[%c0_15, %c0_16] : memref<1x128xf32, #tpu.memory_space<vmem>>, vector<1x128xf32>
    %20 = vector.broadcast %19 : vector<1x128xf32> to vector<16x128xf32>
    %21 = arith.addf %18, %20 : vector<16x128xf32>
    %cst_17 = arith.constant dense<0xFF800000> : vector<16xf32>
    %22 = vector.multi_reduction <maximumf>, %21, %cst_17 [1] : vector<16x128xf32> to vector<16xf32>
    %23 = vector.shape_cast %22 : vector<16xf32> to vector<16x1xf32>
    %24 = vector.broadcast %23 : vector<16x1xf32> to vector<16x128xf32>
    %25 = arith.subf %21, %24 : vector<16x128xf32>
    %26 = math.exp %25 : vector<16x128xf32>
    %cst_18 = arith.constant dense<0.000000e+00> : vector<16xf32>
    %27 = vector.multi_reduction <add>, %26, %cst_18 [1] : vector<16x128xf32> to vector<16xf32>
    %28 = vector.shape_cast %27 : vector<16xf32> to vector<16x1xf32>
    %29 = math.log %28 : vector<16x1xf32>
    %30 = arith.addf %23, %29 : vector<16x1xf32>
    %31 = vector.broadcast %30 : vector<16x1xf32> to vector<16x128xf32>
    %32 = arith.subf %21, %31 : vector<16x128xf32>
    %c0_19 = arith.constant 0 : index
    %c0_20 = arith.constant 0 : index
    %33 = vector.load %arg8[%c0_19, %c0_20] : memref<16x128xf32, #tpu.memory_space<vmem>>, vector<16x128xf32>
    tpu.vector_store %arg8[%c0_19, %c0_20], %32 {strides = array<i32>} : memref<16x128xf32, #tpu.memory_space<vmem>>, vector<16x128xf32>,
    return
  }
  func.func @transform_0(%arg0: i32) -> (i32, i32) {
    %c0_i32 = arith.constant 0 : i32
    %c0_i32_0 = arith.constant 0 : i32
    return %arg0, %c0_i32 : i32, i32
  }
  func.func @transform_1(%arg0: i32) -> (i32, i32) {
    %c0_i32 = arith.constant 0 : i32
    %c0_i32_0 = arith.constant 0 : i32
    %c0_i32_1 = arith.constant 0 : i32
    return %c0_i32, %c0_i32_0 : i32, i32
  }
  func.func @transform_2(%arg0: i32) -> (i32, i32) {
    %c0_i32 = arith.constant 0 : i32
    %c0_i32_0 = arith.constant 0 : i32
    %c0_i32_1 = arith.constant 0 : i32
    return %c0_i32, %c0_i32_0 : i32, i32
  }
  func.func @transform_3(%arg0: i32) -> (i32, i32) {
    %c0_i32 = arith.constant 0 : i32
    %c0_i32_0 = arith.constant 0 : i32
    %c0_i32_1 = arith.constant 0 : i32
    return %c0_i32, %c0_i32_0 : i32, i32
  }
  func.func @transform_4(%arg0: i32) -> (i32, i32) {
    %c0_i32 = arith.constant 0 : i32
    %c0_i32_0 = arith.constant 0 : i32
    %c0_i32_1 = arith.constant 0 : i32
    return %c0_i32, %c0_i32_0 : i32, i32
  }
  func.func @transform_5(%arg0: i32) -> (i32, i32) {
    %c0_i32 = arith.constant 0 : i32
    %c0_i32_0 = arith.constant 0 : i32
    %c0_i32_1 = arith.constant 0 : i32
    return %c0_i32, %c0_i32_0 : i32, i32
  }
  func.func @transform_6(%arg0: i32) -> (i32, i32) {
    %c0_i32 = arith.constant 0 : i32
    %c0_i32_0 = arith.constant 0 : i32
    %c0_i32_1 = arith.constant 0 : i32
    return %c0_i32, %c0_i32_0 : i32, i32
  }
  func.func @transform_7(%arg0: i32) -> (i32, i32) {
    %c0_i32 = arith.constant 0 : i32
    %c0_i32_0 = arith.constant 0 : i32
    return %arg0, %c0_i32 : i32, i32
  }
}

</mosaic_0001>

<llo_original>
// kernel: tpu_custom_call.1
$region0: #{tpu_custom_call.1}
  #allocation0 [shape = 'u32[]', space=smem, size = 0x4, offset = 0x4, fixed_abs, tag = 'smem constant byte address 0x4 - core index']
  #allocation1 [shape = 'u32[144,128]{1,0:T(1,128)}', space=vmem, size = 0x12000, scoped, tag = 'internal scratch']
  %s0 = inlined_call_operand.hbm [shape: bf16[16,128], index: 0, kind: input, shape index: {}]
  %s1 = inlined_call_operand.hbm [shape: bf16[128,128], index: 1, kind: input, shape index: {}]
  %s2 = inlined_call_operand.vmem [shape: f32[1,128], index: 2, kind: input, shape index: {}]
  %s3 = inlined_call_operand.hbm [shape: bf16[128,128], index: 3, kind: input, shape index: {}]
  %s4 = inlined_call_operand.vmem [shape: f32[1,128], index: 4, kind: input, shape index: {}]
  %s5 = inlined_call_operand.hbm [shape: bf16[128,128], index: 5, kind: input, shape index: {}]
  %s6 = inlined_call_operand.vmem [shape: f32[1,128], index: 6, kind: input, shape index: {}]
  %s7 = inlined_call_operand.hbm [shape: f32[16,128], index: 7, kind: output, shape index: {}]
  %s8 = sld [smem:[#allocation0]]
  $region54: #{tpu_custom_call.1} parent=0
    _
  %s10 = ssub.s32 1, %s8
  %s11 = scalar_select 0, %s10, %s8
  $region1: #{tpu_custom_call.1} parent=0
    #allocation2 [shape = 'u8[4096]{0}', space=vmem, size = 0x1000, scoped, tag = 'input window, operand 0, single buffered']
    #allocation3 [shape = 's32[1]{0}', space=sflag, size = 0x4, scoped, tag = 'scoped memory for tpu_custom_call.1']
    #allocation4 [shape = 's32[1]{0}', space=sflag, size = 0x4, scoped, tag = 'scoped memory for tpu_custom_call.1']
    #allocation5 [shape = 'u8[32768]{0}', space=vmem, size = 0x8000, scoped, tag = 'input window, operand 1, single buffered']
    #allocation6 [shape = 's32[1]{0}', space=sflag, size = 0x4, scoped, tag = 'scoped memory for tpu_custom_call.1']
    #allocation7 [shape = 'u8[32768]{0}', space=vmem, size = 0x8000, scoped, tag = 'input window, operand 3, single buffered']
    #allocation8 [shape = 'u8[32768]{0}', space=vmem, size = 0x8000, scoped, tag = 'input window, operand 5, single buffered']
    #allocation9 [shape = 's32[1]{0}', space=sflag, size = 0x4, scoped, tag = 'scoped memory for tpu_custom_call.1']
    #allocation10 [shape = 'u8[8192]{0}', space=vmem, size = 0x2000, scoped, tag = 'output window, operand 0, single buffered']
    %12 = vsyncpa [#allocation3], 0
    %13 = vsyncpa [#allocation6], 0
    %14 = vsyncpa [#allocation9], 0
    %15 = vsyncpa [#allocation4], 0
    // Predicated region
    $region2: #{tpu_custom_call.1} parent=1 // pred_check
      _
    $region3: #{tpu_custom_call.1} parent=1 // pred_check_branch
      %17 = sbr.rel (0) target = $region5
    $region4: #{tpu_custom_call.1} parent=1 // pred_region
      %s19 = ssub.s32 128, 128
      %20 = vsyncadd [#allocation3], %s19
      %s21 = sshll.u32 [#allocation2], 4
      %s22 = int_to_ptr.vmem [resolvable:$true] %s21
      %27 = dma.hbm_to_vmem [thread:$0]  %s0, 128, %s22, [#allocation3], 64, 64, 4
    $region5: #{tpu_custom_call.1} parent=1 // pred_fallthru
      _
    // Predicated region
    $region6: #{tpu_custom_call.1} parent=1 // pred_check
      _
    $region7: #{tpu_custom_call.1} parent=1 // pred_check_branch
      %29 = sbr.rel (0) target = $region9
    $region8: #{tpu_custom_call.1} parent=1 // pred_region
      %s31 = ssub.s32 1024, 1024
      %32 = vsyncadd [#allocation6], %s31
      %s33 = sshll.u32 [#allocation5], 4
      %s34 = int_to_ptr.vmem [resolvable:$true] %s33
      %39 = dma.hbm_to_vmem [thread:$0]  %s1, 1024, %s34, [#allocation6], 64, 64, 4
    $region9: #{tpu_custom_call.1} parent=1 // pred_fallthru
      _
    // Predicated region
    $region10: #{tpu_custom_call.1} parent=1 // pred_check
      _
    $region11: #{tpu_custom_call.1} parent=1 // pred_check_branch
      %41 = sbr.rel (0) target = $region13
    $region12: #{tpu_custom_call.1} parent=1 // pred_region
      _
    $region13: #{tpu_custom_call.1} parent=1 // pred_fallthru
      _
    // Predicated region
    $region14: #{tpu_custom_call.1} parent=1 // pred_check
      _
    $region15: #{tpu_custom_call.1} parent=1 // pred_check_branch
      %43 = sbr.rel (0) target = $region17
    $region16: #{tpu_custom_call.1} parent=1 // pred_region
      %s45 = ssub.s32 1024, 1024
      %46 = vsyncadd [#allocation6], %s45
      %s47 = sshll.u32 [#allocation7], 4
      %s48 = int_to_ptr.vmem [resolvable:$true] %s47
      %53 = dma.hbm_to_vmem [thread:$0]  %s3, 1024, %s48, [#allocation6], 64, 64, 4
    $region17: #{tpu_custom_call.1} parent=1 // pred_fallthru
      _
    // Predicated region
    $region18: #{tpu_custom_call.1} parent=1 // pred_check
      _
    $region19: #{tpu_custom_call.1} parent=1 // pred_check_branch
      %55 = sbr.rel (0) target = $region21
    $region20: #{tpu_custom_call.1} parent=1 // pred_region
      _
    $region21: #{tpu_custom_call.1} parent=1 // pred_fallthru
      _
    // Predicated region
    $region22: #{tpu_custom_call.1} parent=1 // pred_check
      _
    $region23: #{tpu_custom_call.1} parent=1 // pred_check_branch
      %57 = sbr.rel (0) target = $region25
    $region24: #{tpu_custom_call.1} parent=1 // pred_region
      %s59 = ssub.s32 1024, 1024
      %60 = vsyncadd [#allocation9], %s59
      %s61 = sshll.u32 [#allocation8], 4
      %s62 = int_to_ptr.vmem [resolvable:$true] %s61
      %67 = dma.hbm_to_vmem [thread:$0]  %s5, 1024, %s62, [#allocation9], 64, 64, 4
    $region25: #{tpu_custom_call.1} parent=1 // pred_fallthru
      _
    // Predicated region
    $region26: #{tpu_custom_call.1} parent=1 // pred_check
      _
    $region27: #{tpu_custom_call.1} parent=1 // pred_check_branch
      %69 = sbr.rel (0) target = $region29
    $region28: #{tpu_custom_call.1} parent=1 // pred_region
      _
    $region29: #{tpu_custom_call.1} parent=1 // pred_fallthru
      _
    // Predicated region
    $region30: #{tpu_custom_call.1} parent=1 // pred_check
      _
    $region31: #{tpu_custom_call.1} parent=1 // pred_check_branch
      %71 = sbr.rel (0) target = $region33
    $region32: #{tpu_custom_call.1} parent=1 // pred_region
      %72 = dma.done [#allocation3], 128
    $region33: #{tpu_custom_call.1} parent=1 // pred_fallthru
      _
    // Predicated region
    $region34: #{tpu_custom_call.1} parent=1 // pred_check
      _
    $region35: #{tpu_custom_call.1} parent=1 // pred_check_branch
      %74 = sbr.rel (0) target = $region37
    $region36: #{tpu_custom_call.1} parent=1 // pred_region
      %75 = dma.done [#allocation6], 1024
    $region37: #{tpu_custom_call.1} parent=1 // pred_fallthru
      _
    // Predicated region
    $region38: #{tpu_custom_call.1} parent=1 // pred_check
      _
    $region39: #{tpu_custom_call.1} parent=1 // pred_check_branch
      %77 = sbr.rel (0) target = $region41
    $region40: #{tpu_custom_call.1} parent=1 // pred_region
      %78 = dma.done [#allocation6], 1024
    $region41: #{tpu_custom_call.1} parent=1 // pred_fallthru
      _
    // Predicated region
    $region42: #{tpu_custom_call.1} parent=1 // pred_check
      _
    $region43: #{tpu_custom_call.1} parent=1 // pred_check_branch
      %80 = sbr.rel (0) target = $region45
    $region44: #{tpu_custom_call.1} parent=1 // pred_region
      %81 = dma.done [#allocation9], 1024
    $region45: #{tpu_custom_call.1} parent=1 // pred_fallthru
      _
    %v83 = vld [vmem:[#allocation2] sm:$0xf]
    %v84 = vld [vmem:[#allocation2 + $0x4] sm:$0xf]
    %v85 = vld [vmem:[#allocation5] sm:$0xf]
    %v86 = vld [vmem:[#allocation5 + $0x4] sm:$0xf]
    %v87 = vld [vmem:[#allocation5 + $0x8] sm:$0xf]
    %v88 = vld [vmem:[#allocation5 + $0xc] sm:$0xf]
    %v89 = vld [vmem:[#allocation5 + $0x10] sm:$0xf]
    %v90 = vld [vmem:[#allocation5 + $0x14] sm:$0xf]
    %v91 = vld [vmem:[#allocation5 + $0x18] sm:$0xf]
    %v92 = vld [vmem:[#allocation5 + $0x1c] sm:$0xf]
    %v93 = vld [vmem:[#allocation5 + $0x20] sm:$0xf]
    %v94 = vld [vmem:[#allocation5 + $0x24] sm:$0xf]
    %v95 = vld [vmem:[#allocation5 + $0x28] sm:$0xf]
    %v96 = vld [vmem:[#allocation5 + $0x2c] sm:$0xf]
    %v97 = vld [vmem:[#allocation5 + $0x30] sm:$0xf]
    %v98 = vld [vmem:[#allocation5 + $0x34] sm:$0xf]
    %v99 = vld [vmem:[#allocation5 + $0x38] sm:$0xf]
    %v100 = vld [vmem:[#allocation5 + $0x3c] sm:$0xf]
    %v101 = vld [vmem:[%s2] sm:$0x1]
    %v103 = vlaneseq
    %v104 = vshrl.u32 %v103, 7
    %v105 = vsub.s32 0, %v104
    %v106 = vrot.slane %v101, %v105
    %v110 = vunpack.c.l.b16 %v83
    %v111 = vunpack.c.l.b16 %v84
    %v112 = vpack.c.b16 %v111, %v110
    %v130 = vunpack.c.l.b16 %v85
    %v131 = vunpack.c.l.b16 %v86
    %v132 = vunpack.c.l.b16 %v87
    %v133 = vunpack.c.l.b16 %v88
    %v134 = vunpack.c.l.b16 %v89
    %v135 = vunpack.c.l.b16 %v90
    %v136 = vunpack.c.l.b16 %v91
    %v137 = vunpack.c.l.b16 %v92
    %v138 = vunpack.c.l.b16 %v93
    %v139 = vunpack.c.l.b16 %v94
    %v140 = vunpack.c.l.b16 %v95
    %v141 = vunpack.c.l.b16 %v96
    %v142 = vunpack.c.l.b16 %v97
    %v143 = vunpack.c.l.b16 %v98
    %v144 = vunpack.c.l.b16 %v99
    %v145 = vunpack.c.l.b16 %v100
    %v146 = vpack.c.b16 %v131, %v130
    %v147 = vpack.c.b16 %v133, %v132
    %v148 = vpack.c.b16 %v135, %v134
    %v149 = vpack.c.b16 %v137, %v136
    %v150 = vpack.c.b16 %v139, %v138
    %v151 = vpack.c.b16 %v141, %v140
    %v152 = vpack.c.b16 %v143, %v142
    %v153 = vpack.c.b16 %v145, %v144
    %162 = vmatprep.subr.bf16.mxu0 0
    %163 = vmatpush1.bf16.msra.mxu0 %v153
    %164 = vmatprep.subr.bf16.mxu0 0
    %165 = vmatpush1.bf16.msra.mxu0 %v152
    %166 = vmatprep.subr.bf16.mxu0 0
    %167 = vmatpush1.bf16.msra.mxu0 %v151
    %168 = vmatprep.subr.bf16.mxu0 0
    %169 = vmatpush1.bf16.msra.mxu0 %v150
    %170 = vmatprep.subr.bf16.mxu0 0
    %171 = vmatpush1.bf16.msra.mxu0 %v149
    %172 = vmatprep.subr.bf16.mxu0 0
    %173 = vmatpush1.bf16.msra.mxu0 %v148
    %174 = vmatprep.subr.bf16.mxu0 0
    %175 = vmatpush1.bf16.msra.mxu0 %v147
    %176 = vmatprep.subr.bf16.mxu0 0
    %177 = vmatpush1.bf16.msra.mxu0 %v146
    %178 = vmatprep.subr.bf16.mxu0 0
    %179 = vmatpush2.bf16.msra.mxu0 0
    %180 = vmatprep.subr.bf16.mxu0 0
    %181 = vmatpush2.bf16.msra.mxu0 0
    %182 = vmatprep.subr.bf16.mxu0 0
    %183 = vmatpush2.bf16.msra.mxu0 0
    %184 = vmatprep.subr.bf16.mxu0 0
    %185 = vmatpush2.bf16.msra.mxu0 0
    %186 = vmatprep.subr.bf16.mxu0 0
    %187 = vmatpush2.bf16.msra.mxu0 0
    %188 = vmatprep.subr.bf16.mxu0 0
    %189 = vmatpush2.bf16.msra.mxu0 0
    %190 = vmatprep.subr.bf16.mxu0 0
    %191 = vmatpush2.bf16.msra.mxu0 0
    %192 = vmatprep.subr.bf16.mxu0 0
    %193 = vmatpush2.bf16.msra.mxu0 0
    %194 = vmatprep.mubr.bf16.mxu0 0
    %195 = vmatmul.mubr.bf16.gmra.mxu0 %v112
    %v196 = vpop.f32.mrf.mxu0
    %v197 = vadd.f32 %v106, %v196
    %v198 = vpop.f32.mrf.mxu0
    %v199 = vpop.f32.mrf.mxu0
    %v200 = vadd.f32 %v106, %v199
    %v201 = vpop.f32.mrf.mxu0
    %202 = vdwg.mxu0
    %v203 = vmax.f32 %v197, 0.0
    %v204 = vmax.f32 %v200, 0.0
    %v205 = vpack.c.bf16 %v204, %v203
    %v206 = vld [vmem:[#allocation7] sm:$0xf]
    %v207 = vld [vmem:[#allocation7 + $0x4] sm:$0xf]
    %v208 = vld [vmem:[#allocation7 + $0x8] sm:$0xf]
    %v209 = vld [vmem:[#allocation7 + $0xc] sm:$0xf]
    %v210 = vld [vmem:[#allocation7 + $0x10] sm:$0xf]
    %v211 = vld [vmem:[#allocation7 + $0x14] sm:$0xf]
    %v212 = vld [vmem:[#allocation7 + $0x18] sm:$0xf]
    %v213 = vld [vmem:[#allocation7 + $0x1c] sm:$0xf]
    %v214 = vld [vmem:[#allocation7 + $0x20] sm:$0xf]
    %v215 = vld [vmem:[#allocation7 + $0x24] sm:$0xf]
    %v216 = vld [vmem:[#allocation7 + $0x28] sm:$0xf]
    %v217 = vld [vmem:[#allocation7 + $0x2c] sm:$0xf]
    %v218 = vld [vmem:[#allocation7 + $0x30] sm:$0xf]
    %v219 = vld [vmem:[#allocation7 + $0x34] sm:$0xf]
    %v220 = vld [vmem:[#allocation7 + $0x38] sm:$0xf]
    %v221 = vld [vmem:[#allocation7 + $0x3c] sm:$0xf]
    %v222 = vld [vmem:[%s4] sm:$0x1]
    %v224 = vlaneseq
    %v225 = vshrl.u32 %v224, 7
    %v226 = vsub.s32 0, %v225
    %v227 = vrot.slane %v222, %v226
    %v245 = vunpack.c.l.b16 %v206
    %v246 = vunpack.c.l.b16 %v207
    %v247 = vunpack.c.l.b16 %v208
    %v248 = vunpack.c.l.b16 %v209
    %v249 = vunpack.c.l.b16 %v210
    %v250 = vunpack.c.l.b16 %v211
    %v251 = vunpack.c.l.b16 %v212
    %v252 = vunpack.c.l.b16 %v213
    %v253 = vunpack.c.l.b16 %v214
    %v254 = vunpack.c.l.b16 %v215
    %v255 = vunpack.c.l.b16 %v216
    %v256 = vunpack.c.l.b16 %v217
    %v257 = vunpack.c.l.b16 %v218
    %v258 = vunpack.c.l.b16 %v219
    %v259 = vunpack.c.l.b16 %v220
    %v260 = vunpack.c.l.b16 %v221
    %v261 = vpack.c.b16 %v246, %v245
    %v262 = vpack.c.b16 %v248, %v247
    %v263 = vpack.c.b16 %v250, %v249
    %v264 = vpack.c.b16 %v252, %v251
    %v265 = vpack.c.b16 %v254, %v253
    %v266 = vpack.c.b16 %v256, %v255
    %v267 = vpack.c.b16 %v258, %v257
    %v268 = vpack.c.b16 %v260, %v259
    %277 = vmatprep.subr.bf16.mxu0 0
    %278 = vmatpush1.bf16.msra.mxu0 %v268
    %279 = vmatprep.subr.bf16.mxu0 0
    %280 = vmatpush1.bf16.msra.mxu0 %v267
    %281 = vmatprep.subr.bf16.mxu0 0
    %282 = vmatpush1.bf16.msra.mxu0 %v266
    %283 = vmatprep.subr.bf16.mxu0 0
    %284 = vmatpush1.bf16.msra.mxu0 %v265
    %285 = vmatprep.subr.bf16.mxu0 0
    %286 = vmatpush1.bf16.msra.mxu0 %v264
    %287 = vmatprep.subr.bf16.mxu0 0
    %288 = vmatpush1.bf16.msra.mxu0 %v263
    %289 = vmatprep.subr.bf16.mxu0 0
    %290 = vmatpush1.bf16.msra.mxu0 %v262
    %291 = vmatprep.subr.bf16.mxu0 0
    %292 = vmatpush1.bf16.msra.mxu0 %v261
    %293 = vmatprep.subr.bf16.mxu0 0
    %294 = vmatpush2.bf16.msra.mxu0 0
    %295 = vmatprep.subr.bf16.mxu0 0
    %296 = vmatpush2.bf16.msra.mxu0 0
    %297 = vmatprep.subr.bf16.mxu0 0
    %298 = vmatpush2.bf16.msra.mxu0 0
    %299 = vmatprep.subr.bf16.mxu0 0
    %300 = vmatpush2.bf16.msra.mxu0 0
    %301 = vmatprep.subr.bf16.mxu0 0
    %302 = vmatpush2.bf16.msra.mxu0 0
    %303 = vmatprep.subr.bf16.mxu0 0
    %304 = vmatpush2.bf16.msra.mxu0 0
    %305 = vmatprep.subr.bf16.mxu0 0
    %306 = vmatpush2.bf16.msra.mxu0 0
    %307 = vmatprep.subr.bf16.mxu0 0
    %308 = vmatpush2.bf16.msra.mxu0 0
    %309 = vmatprep.mubr.bf16.mxu0 0
    %310 = vmatmul.mubr.bf16.gmra.mxu0 %v205
    %v311 = vpop.f32.mrf.mxu0
    %v312 = vadd.f32 %v227, %v311
    %v313 = vpop.f32.mrf.mxu0
    %v314 = vpop.f32.mrf.mxu0
    %v315 = vadd.f32 %v227, %v314
    %v316 = vpop.f32.mrf.mxu0
    %317 = vdwg.mxu0
    %v318 = vmax.f32 %v312, 0.0
    %v319 = vmax.f32 %v315, 0.0
    %v320 = vpack.c.bf16 %v319, %v318
    %v321 = vld [vmem:[#allocation8] sm:$0xf]
    %v322 = vld [vmem:[#allocation8 + $0x4] sm:$0xf]
    %v323 = vld [vmem:[#allocation8 + $0x8] sm:$0xf]
    %v324 = vld [vmem:[#allocation8 + $0xc] sm:$0xf]
    %v325 = vld [vmem:[#allocation8 + $0x10] sm:$0xf]
    %v326 = vld [vmem:[#allocation8 + $0x14] sm:$0xf]
    %v327 = vld [vmem:[#allocation8 + $0x18] sm:$0xf]
    %v328 = vld [vmem:[#allocation8 + $0x1c] sm:$0xf]
    %v329 = vld [vmem:[#allocation8 + $0x20] sm:$0xf]
    %v330 = vld [vmem:[#allocation8 + $0x24] sm:$0xf]
    %v331 = vld [vmem:[#allocation8 + $0x28] sm:$0xf]
    %v332 = vld [vmem:[#allocation8 + $0x2c] sm:$0xf]
    %v333 = vld [vmem:[#allocation8 + $0x30] sm:$0xf]
    %v334 = vld [vmem:[#allocation8 + $0x34] sm:$0xf]
    %v335 = vld [vmem:[#allocation8 + $0x38] sm:$0xf]
    %v336 = vld [vmem:[#allocation8 + $0x3c] sm:$0xf]
    %v337 = vld [vmem:[%s6] sm:$0x1]
    %v339 = vlaneseq
    %v340 = vshrl.u32 %v339, 7
    %v341 = vsub.s32 0, %v340
    %v342 = vrot.slane %v337, %v341
    %v360 = vunpack.c.l.b16 %v321
    %v361 = vunpack.c.l.b16 %v322
    %v362 = vunpack.c.l.b16 %v323
    %v363 = vunpack.c.l.b16 %v324
    %v364 = vunpack.c.l.b16 %v325
    %v365 = vunpack.c.l.b16 %v326
    %v366 = vunpack.c.l.b16 %v327
    %v367 = vunpack.c.l.b16 %v328
    %v368 = vunpack.c.l.b16 %v329
    %v369 = vunpack.c.l.b16 %v330
    %v370 = vunpack.c.l.b16 %v331
    %v371 = vunpack.c.l.b16 %v332
    %v372 = vunpack.c.l.b16 %v333
    %v373 = vunpack.c.l.b16 %v334
    %v374 = vunpack.c.l.b16 %v335
    %v375 = vunpack.c.l.b16 %v336
    %v376 = vpack.c.b16 %v361, %v360
    %v377 = vpack.c.b16 %v363, %v362
    %v378 = vpack.c.b16 %v365, %v364
    %v379 = vpack.c.b16 %v367, %v366
    %v380 = vpack.c.b16 %v369, %v368
    %v381 = vpack.c.b16 %v371, %v370
    %v382 = vpack.c.b16 %v373, %v372
    %v383 = vpack.c.b16 %v375, %v374
    %392 = vmatprep.subr.bf16.mxu0 0
    %393 = vmatpush1.bf16.msra.mxu0 %v383
    %394 = vmatprep.subr.bf16.mxu0 0
    %395 = vmatpush1.bf16.msra.mxu0 %v382
    %396 = vmatprep.subr.bf16.mxu0 0
    %397 = vmatpush1.bf16.msra.mxu0 %v381
    %398 = vmatprep.subr.bf16.mxu0 0
    %399 = vmatpush1.bf16.msra.mxu0 %v380
    %400 = vmatprep.subr.bf16.mxu0 0
    %401 = vmatpush1.bf16.msra.mxu0 %v379
    %402 = vmatprep.subr.bf16.mxu0 0
    %403 = vmatpush1.bf16.msra.mxu0 %v378
    %404 = vmatprep.subr.bf16.mxu0 0
    %405 = vmatpush1.bf16.msra.mxu0 %v377
    %406 = vmatprep.subr.bf16.mxu0 0
    %407 = vmatpush1.bf16.msra.mxu0 %v376
    %408 = vmatprep.subr.bf16.mxu0 0
    %409 = vmatpush2.bf16.msra.mxu0 0
    %410 = vmatprep.subr.bf16.mxu0 0
    %411 = vmatpush2.bf16.msra.mxu0 0
    %412 = vmatprep.subr.bf16.mxu0 0
    %413 = vmatpush2.bf16.msra.mxu0 0
    %414 = vmatprep.subr.bf16.mxu0 0
    %415 = vmatpush2.bf16.msra.mxu0 0
    %416 = vmatprep.subr.bf16.mxu0 0
    %417 = vmatpush2.bf16.msra.mxu0 0
    %418 = vmatprep.subr.bf16.mxu0 0
    %419 = vmatpush2.bf16.msra.mxu0 0
    %420 = vmatprep.subr.bf16.mxu0 0
    %421 = vmatpush2.bf16.msra.mxu0 0
    %422 = vmatprep.subr.bf16.mxu0 0
    %423 = vmatpush2.bf16.msra.mxu0 0
    %424 = vmatprep.mubr.bf16.mxu0 0
    %425 = vmatmul.mubr.bf16.gmra.mxu0 %v320
    %v426 = vpop.f32.mrf.mxu0
    %v427 = vadd.f32 %v342, %v426
    %v428 = vpop.f32.mrf.mxu0
    %v429 = vpop.f32.mrf.mxu0
    %v430 = vadd.f32 %v342, %v429
    %v431 = vpop.f32.mrf.mxu0
    %432 = vdwg.mxu0
    %433 = vmax.xlane.f32.xlu0 %v427
    %v434 = vpop.xlane.xlu0 %433
    %435 = vmax.xlane.f32.xlu0 %v430
    %v436 = vpop.xlane.xlu0 %435
    %v437 = vsub.f32 %v427, %v434
    %v438 = vsub.f32 %v430, %v436
    %v439 = vmul.f32 %v437, 1.442695
    %v440 = vpow.pop %v439
    %v441 = vmul.f32 %v438, 1.442695
    %v442 = vpow.pop %v441
    %443 = vadd.xlane.f32.xlu0 %v440
    %v444 = vpop.xlane.xlu0 %443
    %445 = vadd.xlane.f32.xlu0 %v442
    %v446 = vpop.xlane.xlu0 %445
    %v447 = vlog2.pop %v444
    %v448 = vmul.f32 %v447, 0.6931472
    %v449 = vlog2.pop %v446
    %v450 = vmul.f32 %v449, 0.6931472
    %v451 = vadd.f32 %v434, %v448
    %v452 = vadd.f32 %v436, %v450
    %v453 = vsub.f32 %v427, %v451
    %v454 = vsub.f32 %v430, %v452
    %455 = vst [vmem:[#allocation10] sm:$0xff] %v453
    %456 = vst [vmem:[#allocation10 + $0x8] sm:$0xff] %v454
    // Predicated region
    $region46: #{tpu_custom_call.1} parent=1 // pred_check
      _
    $region47: #{tpu_custom_call.1} parent=1 // pred_check_branch
      %458 = sbr.rel (0) target = $region49
    $region48: #{tpu_custom_call.1} parent=1 // pred_region
      %s460 = ssub.s32 256, 256
      %461 = vsyncadd [#allocation4], %s460
      %s462 = sshll.u32 [#allocation10], 4
      %s463 = int_to_ptr.vmem [resolvable:$true] %s462
      %468 = dma.vmem_to_hbm [thread:$0]  %s463, 256, %s7, [#allocation4], 128, 128, 8
    $region49: #{tpu_custom_call.1} parent=1 // pred_fallthru
      _
    // Predicated region
    $region50: #{tpu_custom_call.1} parent=1 // pred_check
      _
    $region51: #{tpu_custom_call.1} parent=1 // pred_check_branch
      %470 = sbr.rel (0) target = $region53
    $region52: #{tpu_custom_call.1} parent=1 // pred_region
      %471 = dma.done [#allocation4], 256
    $region53: #{tpu_custom_call.1} parent=1 // pred_fallthru
      _
    %472 = vsyncpa [#allocation3], 1
    %473 = vsyncpa [#allocation6], 1
    %474 = vsyncpa [#allocation9], 1
    %475 = vsyncpa [#allocation4], 1

</llo_original>
